<compile_context>
chip_gen: v6e
topology: v6e:2x2x1
jax: 0.10.0
libtpu: 0.0.40
codegen_flags: <defaults>
</compile_context>

<pallas_src>
import jax
import jax.numpy as jnp
from jax.experimental import pallas as pl
from jax.experimental.pallas import tpu as pltpu
import numpy as np

# ----------------------------- configuration -------------------------------
# mirrors PromptNet.__init__ arguments at small synthetic sizes
B       = 2          # batch
C_IN    = 3          # image channels (NCHW)
H = W   = 16         # spatial
PATCH   = 8          # patch size -> P = (16/8)^2 = 4 patches per image
P       = (H // PATCH) * (W // PATCH)
K       = C_IN * PATCH * PATCH       # flattened patch dim = 192
K_PAD   = 256                        # lane-aligned (multiple of 128)
EMBD    = 32         # args['embd_dim']  (visual transformer width)
EMB_D   = 32         # clip_model.ln_final.weight.shape[0]  (text width)
FEAT    = 32         # image_encoder.output_dim == text feature dim
LT      = 4          # args['textual_prompt_length']
LV      = 2          # args['visual_prompt_length']
NCLASS  = 2          # dataset == 'cddb' -> class_num = 2
CSC     = False      # args['CSC']
LOGIT_SCALE_INIT = float(np.log(1.0 / 0.07))   # CLIP logit_scale init
EPS     = 1e-12                                # L2-norm epsilon (zero-row safe)

assert EMBD == EMB_D == FEAT, "packing below assumes a single shared width"
assert LV <= 8 and LT <= 8 and NCLASS <= 8

# packed-parameter row offsets (each section zero-padded to an 8-row multiple)
ROW_WP  = 0                    # w_patch        [K_PAD, EMBD]
ROW_VP  = ROW_WP + K_PAD       # visual_prompt  [LV -> 8, EMBD]
ROW_WI  = ROW_VP + 8           # w_img_proj     [EMBD, FEAT]
ROW_CTX = ROW_WI + EMBD        # textual_prompt [LT -> 8, EMB_D]
ROW_CLS = ROW_CTX + 8          # class_emb      [NCLASS -> 8, EMB_D]
ROW_WT  = ROW_CLS + 8          # w_txt_proj     [EMB_D, FEAT]
ROWS    = ROW_WT + EMB_D       # = 344 (multiple of 8)

_VMEM = pl.BlockSpec(memory_space=pltpu.MemorySpace.VMEM)
_SMEM = pl.BlockSpec(memory_space=pltpu.MemorySpace.SMEM)


# ------------------------------- fused kernel -------------------------------
def prompt_net_kernel(scale_ref, patch_ref, params_ref, out_ref):
    """Fused PromptNet forward.

    scale_ref  : [1, 1]  SMEM   raw logit_scale parameter (pre-exp)
    patch_ref  : [B, K_PAD]     patch pixels pre-pooled over P (zero-padded lanes)
    params_ref : [ROWS, 32]     packed params (see ROW_* offsets, 8-aligned)
    out_ref    : [B, NCLASS]    scaled cosine logits
    """
    w_patch = params_ref[ROW_WP:ROW_WP + K_PAD, :]     # [K_PAD, EMBD]
    vprompt = params_ref[ROW_VP:ROW_VP + 8, :]         # [8, EMBD] (rows >= LV are 0)
    w_iproj = params_ref[ROW_WI:ROW_WI + EMBD, :]      # [EMBD, FEAT]
    ctx     = params_ref[ROW_CTX:ROW_CTX + 8, :]       # [8, EMB_D] (rows >= LT are 0)
    cls     = params_ref[ROW_CLS:ROW_CLS + 8, :]       # [8, EMB_D] (rows >= NCLASS are 0)
    w_tproj = params_ref[ROW_WT:ROW_WT + EMB_D, :]     # [EMB_D, FEAT]

    # ---- image branch -------------------------------------------------------
    # Patches are pre-pooled over P in the wrapper (linearity of patch embed),
    # so the patch-embed matmul is [B, K_PAD] @ [K_PAD, EMBD].
    pooled_img = jnp.dot(patch_ref[...], w_patch,
                         preferred_element_type=jnp.float32)          # [B, EMBD]
    pooled_img = pooled_img + jnp.sum(vprompt, axis=0, keepdims=True)  # prefix prompts
    img = jnp.dot(pooled_img, w_iproj,
                  preferred_element_type=jnp.float32)                  # [B, FEAT]

    # ---- text branch (CSC=False: single shared ctx) -------------------------
    pooled_txt = cls + jnp.sum(ctx, axis=0, keepdims=True)             # [8, EMB_D]
    txt = jnp.dot(pooled_txt, w_tproj,
                  preferred_element_type=jnp.float32)                  # [8, FEAT]
    # NOTE: mean-pool scalings /(P+LV), /(LT+1) dropped — cancelled by the
    # L2 normalization below (exact up to EPS).

    # ---- normalize + scaled cosine logits ------------------------------------
    # exp on a [1,1] broadcast (vector EUP path); scale folded into img rsqrt.
    scale = jnp.exp(jnp.broadcast_to(scale_ref[0, 0], (1, 1)))         # [1, 1]
    img = img * (scale * jax.lax.rsqrt(
        jnp.sum(img * img, axis=-1, keepdims=True) + EPS))
    txt = txt * jax.lax.rsqrt(
        jnp.sum(txt * txt, axis=-1, keepdims=True) + EPS)

    # contract last axes of both operands -> no explicit transpose of txt
    sim = jax.lax.dot_general(
        img, txt, dimension_numbers=(((1,), (1,)), ((), ())),
        preferred_element_type=jnp.float32)                            # [B, 8]
    out_ref[...] = sim[:, :NCLASS]                                     # drop pad rows


# ------------------------------- wrappers ------------------------------------
def _patchify_nchw(x):
    """NCHW image -> [B, P, C*ph*pw] flattened non-overlapping patches."""
    b, c, h, w = x.shape
    ph = pw = PATCH
    x = x.reshape(b, c, h // ph, ph, w // pw, pw)
    x = x.transpose(0, 2, 4, 1, 3, 5)                # [B, Hp, Wp, C, ph, pw]
    return x.reshape(b, (h // ph) * (w // pw), c * ph * pw)


def _pad_rows(x, rows):
    return jnp.pad(x, ((0, rows - x.shape[0]), (0, 0)))


def _pack_params(params):
    """Pack the six tiny parameter tensors into one [ROWS, 32] VMEM operand."""
    packed = jnp.concatenate(
        [
            _pad_rows(params["w_patch"], K_PAD),        # [256, 32]
            _pad_rows(params["visual_prompt"], 8),      # [8,   32]
            params["w_img_proj"],                       # [32,  32]
            _pad_rows(params["textual_prompt"], 8),     # [8,   32]
            _pad_rows(params["class_emb"], 8),          # [8,   32]
            params["w_txt_proj"],                       # [32,  32]
        ],
        axis=0,
    )
    assert packed.shape == (ROWS, EMBD), packed.shape
    return packed


@jax.jit
def prompt_net_forward(image, params):
    """PromptNet.forward: image [B, C, H, W] (NCHW) -> logits [B, NCLASS]."""
    # pre-pool patch pixels over P (linearity of the patch embedding), pad lanes
    pooled_patches = _patchify_nchw(image).astype(jnp.float32).sum(axis=1)  # [B, K]
    pooled_patches = jnp.pad(pooled_patches, ((0, 0), (0, K_PAD - K)))      # [B, 256]
    packed = _pack_params(params)                                           # [344, 32]

    return pl.pallas_call(
        prompt_net_kernel,
        out_shape=jax.ShapeDtypeStruct((B, NCLASS), jnp.float32),
        in_specs=[_SMEM, _VMEM, _VMEM],
        out_specs=_VMEM,
    )(params["logit_scale"], pooled_patches, packed)


def _reference_forward(image, params):
    """Pure-JAX reference with the original (unsimplified) semantics."""
    patches = _patchify_nchw(image).astype(jnp.float32)        # [B, P, K]
    tok = patches.reshape(B * P, K) @ params["w_patch"]
    per_img = tok.reshape(B, P, EMBD).sum(axis=1)
    pooled = (per_img + params["visual_prompt"].sum(0)[None]) / (P + LV)
    img_feat = pooled @ params["w_img_proj"]

    ctx_sum = params["textual_prompt"].sum(0)[None]
    txt_pooled = (params["class_emb"] + ctx_sum) / (LT + 1)
    txt_feat = txt_pooled @ params["w_txt_proj"]

    img_feat = img_feat / jnp.sqrt(
        jnp.sum(img_feat * img_feat, axis=-1, keepdims=True) + EPS)
    txt_feat = txt_feat / jnp.sqrt(
        jnp.sum(txt_feat * txt_feat, axis=-1, keepdims=True) + EPS)
    scale = jnp.exp(params["logit_scale"][0, 0])
    return scale * img_feat @ txt_feat.T


def init_params(key):
    ks = jax.random.split(key, 6)
    return {
        "w_patch":        0.02 * jax.random.normal(ks[0], (K, EMBD),       jnp.float32),
        "w_img_proj":     0.02 * jax.random.normal(ks[1], (EMBD, FEAT),    jnp.float32),
        "visual_prompt":  0.02 * jax.random.normal(ks[2], (LV, EMBD),      jnp.float32),
        "textual_prompt": 0.02 * jax.random.normal(ks[3], (LT, EMB_D),     jnp.float32),
        "class_emb":      0.02 * jax.random.normal(ks[4], (NCLASS, EMB_D), jnp.float32),
        "w_txt_proj":     0.02 * jax.random.normal(ks[5], (EMB_D, FEAT),   jnp.float32),
        "logit_scale":    jnp.full((1, 1), LOGIT_SCALE_INIT, jnp.float32),
    }


if __name__ == "__main__":
    key = jax.random.PRNGKey(0)
    k_img, k_par = jax.random.split(key)
    image = jax.random.normal(k_img, (B, C_IN, H, W), jnp.float32)  # NCHW
    params = init_params(k_par)

    logits = jax.block_until_ready(prompt_net_forward(image, params))
    ref = _reference_forward(image, params)

    assert logits.shape == (B, NCLASS), logits.shape
    np.testing.assert_allclose(np.asarray(logits), np.asarray(ref),
                               rtol=1e-4, atol=1e-4)
    print("KERNEL_OK")
</pallas_src>

<mosaic_0001>
module attributes {stable_mosaic.version = 11 : i64} {
  func.func @prompt_net_kernel(%arg0: memref<1x1xf32, #tpu.memory_space<smem>>, %arg1: memref<2x256xf32, #tpu.memory_space<vmem>>, %arg2: memref<344x32xf32, #tpu.memory_space<vmem>>, %arg3: memref<2x2xf32, #tpu.memory_space<vmem>>) attributes {dimension_semantics = [], scalar_prefetch = 0 : i64, scratch_operands = 0 : i64, tpu.core_type = #tpu.core_type<tc>} {
    %c0 = arith.constant 0 : index
    %c0_0 = arith.constant 0 : index
    %0 = vector.load %arg2[%c0, %c0_0] : memref<344x32xf32, #tpu.memory_space<vmem>>, vector<256x32xf32>
    %c256 = arith.constant 256 : index
    %c0_1 = arith.constant 0 : index
    %1 = vector.load %arg2[%c256, %c0_1] : memref<344x32xf32, #tpu.memory_space<vmem>>, vector<8x32xf32>
    %c264 = arith.constant 264 : index
    %c0_2 = arith.constant 0 : index
    %2 = vector.load %arg2[%c264, %c0_2] : memref<344x32xf32, #tpu.memory_space<vmem>>, vector<32x32xf32>
    %c296 = arith.constant 296 : index
    %c0_3 = arith.constant 0 : index
    %3 = vector.load %arg2[%c296, %c0_3] : memref<344x32xf32, #tpu.memory_space<vmem>>, vector<8x32xf32>
    %c304 = arith.constant 304 : index
    %c0_4 = arith.constant 0 : index
    %4 = vector.load %arg2[%c304, %c0_4] : memref<344x32xf32, #tpu.memory_space<vmem>>, vector<8x32xf32>
    %c312 = arith.constant 312 : index
    %c0_5 = arith.constant 0 : index
    %5 = vector.load %arg2[%c312, %c0_5] : memref<344x32xf32, #tpu.memory_space<vmem>>, vector<32x32xf32>
    %c0_6 = arith.constant 0 : index
    %c0_7 = arith.constant 0 : index
    %6 = vector.load %arg1[%c0_6, %c0_7] : memref<2x256xf32, #tpu.memory_space<vmem>>, vector<2x256xf32>
    %cst = arith.constant dense<0.000000e+00> : vector<2x32xf32>
    %7 = tpu.matmul %6, %0, %cst {dimension_numbers = #tpu.dot_dimension_numbers<[1], [0], [0], [1], [0, 0, 1, 1], [], []>} : vector<2x256xf32>, vector<256x32xf32>, vector<2x32xf32> -> vector<2x32xf32>
    %cst_8 = arith.constant dense<0.000000e+00> : vector<32xf32>
    %8 = vector.multi_reduction <add>, %1, %cst_8 [0] : vector<8x32xf32> to vector<32xf32>
    %9 = vector.shape_cast %8 : vector<32xf32> to vector<1x32xf32>
    %10 = vector.broadcast %9 : vector<1x32xf32> to vector<2x32xf32>
    %11 = arith.addf %7, %10 : vector<2x32xf32>
    %cst_9 = arith.constant dense<0.000000e+00> : vector<2x32xf32>
    %12 = tpu.matmul %11, %2, %cst_9 {dimension_numbers = #tpu.dot_dimension_numbers<[1], [0], [0], [1], [0, 0, 1, 1], [], []>} : vector<2x32xf32>, vector<32x32xf32>, vector<2x32xf32> -> vector<2x32xf32>
    %cst_10 = arith.constant dense<0.000000e+00> : vector<32xf32>
    %13 = vector.multi_reduction <add>, %3, %cst_10 [0] : vector<8x32xf32> to vector<32xf32>
    %14 = vector.shape_cast %13 : vector<32xf32> to vector<1x32xf32>
    %15 = vector.broadcast %14 : vector<1x32xf32> to vector<8x32xf32>
    %16 = arith.addf %4, %15 : vector<8x32xf32>
    %cst_11 = arith.constant dense<0.000000e+00> : vector<8x32xf32>
    %17 = tpu.matmul %16, %5, %cst_11 {dimension_numbers = #tpu.dot_dimension_numbers<[1], [0], [0], [1], [0, 0, 1, 1], [], []>} : vector<8x32xf32>, vector<32x32xf32>, vector<8x32xf32> -> vector<8x32xf32>
    %c0_12 = arith.constant 0 : index
    %c0_13 = arith.constant 0 : index
    %18 = memref.load %arg0[%c0_12, %c0_13] : memref<1x1xf32, #tpu.memory_space<smem>>
    %19 = vector.broadcast %18 : f32 to vector<1x1xf32>
    %20 = math.exp %19 : vector<1x1xf32>
    %21 = arith.mulf %12, %12 : vector<2x32xf32>
    %cst_14 = arith.constant dense<0.000000e+00> : vector<2xf32>
    %22 = vector.multi_reduction <add>, %21, %cst_14 [1] : vector<2x32xf32> to vector<2xf32>
    %23 = vector.shape_cast %22 : vector<2xf32> to vector<2x1xf32>
    %cst_15 = arith.constant 9.99999996E-13 : f32
    %24 = vector.broadcast %cst_15 : f32 to vector<2x1xf32>
    %25 = arith.addf %23, %24 : vector<2x1xf32>
    %26 = math.rsqrt %25 : vector<2x1xf32>
    %27 = vector.broadcast %20 : vector<1x1xf32> to vector<2x1xf32>
    %28 = arith.mulf %27, %26 : vector<2x1xf32>
    %29 = vector.broadcast %28 : vector<2x1xf32> to vector<2x32xf32>
    %30 = arith.mulf %12, %29 : vector<2x32xf32>
    %31 = arith.mulf %17, %17 : vector<8x32xf32>
    %cst_16 = arith.constant dense<0.000000e+00> : vector<8xf32>
    %32 = vector.multi_reduction <add>, %31, %cst_16 [1] : vector<8x32xf32> to vector<8xf32>
    %33 = vector.shape_cast %32 : vector<8xf32> to vector<8x1xf32>
    %cst_17 = arith.constant 9.99999996E-13 : f32
    %34 = vector.broadcast %cst_17 : f32 to vector<8x1xf32>
    %35 = arith.addf %33, %34 : vector<8x1xf32>
    %36 = math.rsqrt %35 : vector<8x1xf32>
    %37 = vector.broadcast %36 : vector<8x1xf32> to vector<8x32xf32>
    %38 = arith.mulf %17, %37 : vector<8x32xf32>
    %cst_18 = arith.constant dense<0.000000e+00> : vector<2x8xf32>
    %39 = tpu.matmul %30, %38, %cst_18 {dimension_numbers = #tpu.dot_dimension_numbers<[1], [1], [0], [0], [0, 0, 1, 0], [], []>} : vector<2x32xf32>, vector<8x32xf32>, vector<2x8xf32> -> vector<2x8xf32>
    %40 = vector.extract_strided_slice %39 {offsets = [0, 0], sizes = [2, 2], strides = [1, 1]} : vector<2x8xf32> to vector<2x2xf32>
    %c0_19 = arith.constant 0 : index
    %c0_20 = arith.constant 0 : index
    %41 = vector.load %arg3[%c0_19, %c0_20] : memref<2x2xf32, #tpu.memory_space<vmem>>, vector<2x2xf32>
    tpu.vector_store %arg3[%c0_19, %c0_20], %40 {strides = array<i32>} : memref<2x2xf32, #tpu.memory_space<vmem>>, vector<2x2xf32>,
    return
  }
}

</mosaic_0001>

<llo_original>
// kernel: prompt_net_forward.1
$region0: #{prompt_net_forward.1}
  #allocation0 [shape = 'u32[]', space=smem, size = 0x4, offset = 0x4, fixed_abs, tag = 'smem constant byte address 0x4 - core index']
  #allocation1 [shape = 'u32[144,128]{1,0:T(1,128)}', space=vmem, size = 0x12000, scoped, tag = 'internal scratch']
  #allocation2 [shape = 'f32[1,1]{1,0:T(1,128)S(6)}', space=smem, size = 0x200, scoped, tag = 'scoped memory for prompt_net_forward.1']
  %s0 = inlined_call_operand.<no memory space> [shape: f32[1,1], index: 0, kind: input, shape index: {}]
  %s1 = inlined_call_operand.vmem [shape: f32[2,256], index: 1, kind: input, shape index: {}]
  %s2 = inlined_call_operand.vmem [shape: f32[344,32], index: 2, kind: input, shape index: {}]
  %s3 = inlined_call_operand.hbm [shape: f32[2,2], index: 3, kind: output, shape index: {}]
  %s4 = sld [smem:[#allocation0]]
  $region22: #{prompt_net_forward.1} parent=0
    _
  %s6 = ssub.s32 1, %s4
  %s7 = scalar_select 0, %s6, %s4
  %8 = sst [smem:[#allocation2]] %s0
  $region1: #{prompt_net_forward.1} parent=0
    #allocation3 [shape = 'u8[1024]{0}', space=vmem, size = 0x400, scoped, tag = 'output window, operand 0, single buffered']
    #allocation4 [shape = 's32[1]{0}', space=sflag, size = 0x4, scoped, tag = 'scoped memory for prompt_net_forward.1']
    %9 = vsyncpa [#allocation4], 0
    // Predicated region
    $region2: #{prompt_net_forward.1} parent=1 // pred_check
      _
    $region3: #{prompt_net_forward.1} parent=1 // pred_check_branch
      %11 = sbr.rel (0) target = $region5
    $region4: #{prompt_net_forward.1} parent=1 // pred_region
      _
    $region5: #{prompt_net_forward.1} parent=1 // pred_fallthru
      _
    // Predicated region
    $region6: #{prompt_net_forward.1} parent=1 // pred_check
      _
    $region7: #{prompt_net_forward.1} parent=1 // pred_check_branch
      %13 = sbr.rel (0) target = $region9
    $region8: #{prompt_net_forward.1} parent=1 // pred_region
      _
    $region9: #{prompt_net_forward.1} parent=1 // pred_fallthru
      _
    // Predicated region
    $region10: #{prompt_net_forward.1} parent=1 // pred_check
      _
    $region11: #{prompt_net_forward.1} parent=1 // pred_check_branch
      %15 = sbr.rel (0) target = $region13
    $region12: #{prompt_net_forward.1} parent=1 // pred_region
      _
    $region13: #{prompt_net_forward.1} parent=1 // pred_fallthru
      _
    %v16 = vld [vmem:[%s2] sm:$0xff]
    %v17 = vld [vmem:[%s2 + $0x8] sm:$0xff]
    %v18 = vld [vmem:[%s2 + $0x10] sm:$0xff]
    %v19 = vld [vmem:[%s2 + $0x18] sm:$0xff]
    %v20 = vld [vmem:[%s2 + $0x20] sm:$0xff]
    %v21 = vld [vmem:[%s2 + $0x28] sm:$0xff]
    %v22 = vld [vmem:[%s2 + $0x30] sm:$0xff]
    %v23 = vld [vmem:[%s2 + $0x38] sm:$0xff]
    %v24 = vld [vmem:[%s2 + $0x40] sm:$0xff]
    %v25 = vld [vmem:[%s2 + $0x48] sm:$0xff]
    %v26 = vld [vmem:[%s2 + $0x50] sm:$0xff]
    %v27 = vld [vmem:[%s2 + $0x58] sm:$0xff]
    %v28 = vld [vmem:[%s2 + $0x60] sm:$0xff]
    %v29 = vld [vmem:[%s2 + $0x68] sm:$0xff]
    %v30 = vld [vmem:[%s2 + $0x70] sm:$0xff]
    %v31 = vld [vmem:[%s2 + $0x78] sm:$0xff]
    %v32 = vld [vmem:[%s2 + $0x80] sm:$0xff]
    %v33 = vld [vmem:[%s2 + $0x88] sm:$0xff]
    %v34 = vld [vmem:[%s2 + $0x90] sm:$0xff]
    %v35 = vld [vmem:[%s2 + $0x98] sm:$0xff]
    %v36 = vld [vmem:[%s2 + $0xa0] sm:$0xff]
    %v37 = vld [vmem:[%s2 + $0xa8] sm:$0xff]
    %v38 = vld [vmem:[%s2 + $0xb0] sm:$0xff]
    %v39 = vld [vmem:[%s2 + $0xb8] sm:$0xff]
    %v40 = vld [vmem:[%s2 + $0xc0] sm:$0xff]
    %v41 = vld [vmem:[%s2 + $0xc8] sm:$0xff]
    %v42 = vld [vmem:[%s2 + $0xd0] sm:$0xff]
    %v43 = vld [vmem:[%s2 + $0xd8] sm:$0xff]
    %v44 = vld [vmem:[%s2 + $0xe0] sm:$0xff]
    %v45 = vld [vmem:[%s2 + $0xe8] sm:$0xff]
    %v46 = vld [vmem:[%s2 + $0xf0] sm:$0xff]
    %v47 = vld [vmem:[%s2 + $0xf8] sm:$0xff]
    %v48 = vld [vmem:[%s2 + $0x100] sm:$0xff]
    %v49 = vld [vmem:[%s2 + $0x108] sm:$0xff]
    %v50 = vld [vmem:[%s2 + $0x110] sm:$0xff]
    %v51 = vld [vmem:[%s2 + $0x118] sm:$0xff]
    %v52 = vld [vmem:[%s2 + $0x120] sm:$0xff]
    %v53 = vld [vmem:[%s2 + $0x128] sm:$0xff]
    %v54 = vld [vmem:[%s2 + $0x130] sm:$0xff]
    %v55 = vld [vmem:[%s2 + $0x138] sm:$0xff]
    %v56 = vld [vmem:[%s2 + $0x140] sm:$0xff]
    %v57 = vld [vmem:[%s2 + $0x148] sm:$0xff]
    %v58 = vld [vmem:[%s2 + $0x150] sm:$0xff]
    %v59 = vld [vmem:[%s1] sm:$0xf]
    %vm60 = vcmask 261120
    %v61 = vsel %vm60, %v48, 0.0
    %v62 = vrot.slane %v61, 4
    %v63 = vadd.f32 %v61, %v62
    %v64 = vrot.slane %v63, 2
    %v65 = vadd.f32 %v63, %v64
    %v66 = vrot.slane %v65, 1
    %v67 = vadd.f32 %v65, %v66
    %v70 = vunpack.c.l.s4 1983009808
    %v71 = vunpack.c.0.s8 %v70
    %v72 = vlaneseq
    %v73 = vshrl.u32 %v72, 7
    %v74 = vsub.s32 %v71, %v73
    %v75 = vrot.slane %v59, %v74
    %v76 = vcombine.high %v75, %v75
    %79 = vmatprep.subr.mxu0 0.0
    %80 = vmatpush1.msra.mxu0 %v31
    %81 = vmatprep.subr.mxu0 0.0
    %82 = vmatpush1.msra.mxu0 %v30
    %83 = vmatprep.subr.mxu0 0.0
    %84 = vmatpush1.msra.mxu0 %v29
    %85 = vmatprep.subr.mxu0 0.0
    %86 = vmatpush1.msra.mxu0 %v28
    %87 = vmatprep.subr.mxu0 0.0
    %88 = vmatpush1.msra.mxu0 %v27
    %89 = vmatprep.subr.mxu0 0.0
    %90 = vmatpush1.msra.mxu0 %v26
    %91 = vmatprep.subr.mxu0 0.0
    %92 = vmatpush1.msra.mxu0 %v25
    %93 = vmatprep.subr.mxu0 0.0
    %94 = vmatpush1.msra.mxu0 %v24
    %95 = vmatprep.subr.mxu0 0.0
    %96 = vmatpush1.msra.mxu0 %v23
    %97 = vmatprep.subr.mxu0 0.0
    %98 = vmatpush1.msra.mxu0 %v22
    %99 = vmatprep.subr.mxu0 0.0
    %100 = vmatpush1.msra.mxu0 %v21
    %101 = vmatprep.subr.mxu0 0.0
    %102 = vmatpush1.msra.mxu0 %v20
    %103 = vmatprep.subr.mxu0 0.0
    %104 = vmatpush1.msra.mxu0 %v19
    %105 = vmatprep.subr.mxu0 0.0
    %106 = vmatpush1.msra.mxu0 %v18
    %107 = vmatprep.subr.mxu0 0.0
    %108 = vmatpush1.msra.mxu0 %v17
    %109 = vmatprep.subr.mxu0 0.0
    %110 = vmatpush1.msra.mxu0 %v16
    %111 = vmatprep.subr.mxu0 0.0
    %112 = vmatpush2.msra.mxu0 %v47
    %113 = vmatprep.subr.mxu0 0.0
    %114 = vmatpush2.msra.mxu0 %v46
    %115 = vmatprep.subr.mxu0 0.0
    %116 = vmatpush2.msra.mxu0 %v45
    %117 = vmatprep.subr.mxu0 0.0
    %118 = vmatpush2.msra.mxu0 %v44
    %119 = vmatprep.subr.mxu0 0.0
    %120 = vmatpush2.msra.mxu0 %v43
    %121 = vmatprep.subr.mxu0 0.0
    %122 = vmatpush2.msra.mxu0 %v42
    %123 = vmatprep.subr.mxu0 0.0
    %124 = vmatpush2.msra.mxu0 %v41
    %125 = vmatprep.subr.mxu0 0.0
    %126 = vmatpush2.msra.mxu0 %v40
    %127 = vmatprep.subr.mxu0 0.0
    %128 = vmatpush2.msra.mxu0 %v39
    %129 = vmatprep.subr.mxu0 0.0
    %130 = vmatpush2.msra.mxu0 %v38
    %131 = vmatprep.subr.mxu0 0.0
    %132 = vmatpush2.msra.mxu0 %v37
    %133 = vmatprep.subr.mxu0 0.0
    %134 = vmatpush2.msra.mxu0 %v36
    %135 = vmatprep.subr.mxu0 0.0
    %136 = vmatpush2.msra.mxu0 %v35
    %137 = vmatprep.subr.mxu0 0.0
    %138 = vmatpush2.msra.mxu0 %v34
    %139 = vmatprep.subr.mxu0 0.0
    %140 = vmatpush2.msra.mxu0 %v33
    %141 = vmatprep.subr.mxu0 0.0
    %142 = vmatpush2.msra.mxu0 %v32
    %143 = vmatprep.mubr.f32.mxu0 %v76
    %144 = vmatmul.mubr.f32.gmra.mxu0 %v75
    %v145 = vpop.f32.mrf.mxu0
    %v146 = vadd.f32 %v67, %v145
    %v147 = vpop.f32.mrf.mxu0
    %148 = vdwg.mxu0
    %v150 = vsel %vm60, %v146, 0
    %152 = vmatprep.subr.mxu0 0.0
    %153 = vmatpush1.msra.mxu0 0.0
    %154 = vmatprep.subr.mxu0 0.0
    %155 = vmatpush1.msra.mxu0 0.0
    %156 = vmatprep.subr.mxu0 0.0
    %157 = vmatpush1.msra.mxu0 0.0
    %158 = vmatprep.subr.mxu0 0.0
    %159 = vmatpush1.msra.mxu0 0.0
    %160 = vmatprep.subr.mxu0 0.0
    %161 = vmatpush1.msra.mxu0 0.0
    %162 = vmatprep.subr.mxu0 0.0
    %163 = vmatpush1.msra.mxu0 0.0
    %164 = vmatprep.subr.mxu0 0.0
    %165 = vmatpush1.msra.mxu0 0.0
    %166 = vmatprep.subr.mxu0 0.0
    %167 = vmatpush1.msra.mxu0 0.0
    %168 = vmatprep.subr.mxu0 0.0
    %169 = vmatpush1.msra.mxu0 0.0
    %170 = vmatprep.subr.mxu0 0.0
    %171 = vmatpush1.msra.mxu0 0.0
    %172 = vmatprep.subr.mxu0 0.0
    %173 = vmatpush1.msra.mxu0 0.0
    %174 = vmatprep.subr.mxu0 0.0
    %175 = vmatpush1.msra.mxu0 0.0
    %176 = vmatprep.subr.mxu0 0.0
    %177 = vmatpush1.msra.mxu0 %v52
    %178 = vmatprep.subr.mxu0 0.0
    %179 = vmatpush1.msra.mxu0 %v51
    %180 = vmatprep.subr.mxu0 0.0
    %181 = vmatpush1.msra.mxu0 %v50
    %182 = vmatprep.subr.mxu0 0.0
    %183 = vmatpush1.msra.mxu0 %v49
    %184 = vmatprep.subr.mxu0 0.0
    %185 = vmatpush2.msra.mxu0 0.0
    %186 = vmatprep.subr.mxu0 0.0
    %187 = vmatpush2.msra.mxu0 0.0
    %188 = vmatprep.subr.mxu0 0.0
    %189 = vmatpush2.msra.mxu0 0.0
    %190 = vmatprep.subr.mxu0 0.0
    %191 = vmatpush2.msra.mxu0 0.0
    %192 = vmatprep.subr.mxu0 0.0
    %193 = vmatpush2.msra.mxu0 0.0
    %194 = vmatprep.subr.mxu0 0.0
    %195 = vmatpush2.msra.mxu0 0.0
    %196 = vmatprep.subr.mxu0 0.0
    %197 = vmatpush2.msra.mxu0 0.0
    %198 = vmatprep.subr.mxu0 0.0
    %199 = vmatpush2.msra.mxu0 0.0
    %200 = vmatprep.subr.mxu0 0.0
    %201 = vmatpush2.msra.mxu0 0.0
    %202 = vmatprep.subr.mxu0 0.0
    %203 = vmatpush2.msra.mxu0 0.0
    %204 = vmatprep.subr.mxu0 0.0
    %205 = vmatpush2.msra.mxu0 0.0
    %206 = vmatprep.subr.mxu0 0.0
    %207 = vmatpush2.msra.mxu0 0.0
    %208 = vmatprep.subr.mxu0 0.0
    %209 = vmatpush2.msra.mxu0 0.0
    %210 = vmatprep.subr.mxu0 0.0
    %211 = vmatpush2.msra.mxu0 0.0
    %212 = vmatprep.subr.mxu0 0.0
    %213 = vmatpush2.msra.mxu0 0.0
    %214 = vmatprep.subr.mxu0 0.0
    %215 = vmatpush2.msra.mxu0 0.0
    %216 = vmatprep.mubr.f32.mxu0 0.0
    %217 = vmatmul.mubr.f32.gmra.mxu0 %v150
    %v218 = vpop.f32.mrf.mxu0
    %v219 = vadd.f32 0.0, %v218
    %v220 = vpop.f32.mrf.mxu0
    %221 = vdwg.mxu0
    %v222 = vsel %vm60, %v53, 0.0
    %v223 = vrot.slane %v222, 4
    %v224 = vadd.f32 %v222, %v223
    %v225 = vrot.slane %v224, 2
    %v226 = vadd.f32 %v224, %v225
    %v227 = vrot.slane %v226, 1
    %v228 = vadd.f32 %v226, %v227
    %v229 = vadd.f32 %v54, %v228
    %v231 = vsel %vm60, %v229, 0
    %233 = vmatprep.subr.mxu0 0.0
    %234 = vmatpush1.msra.mxu0 0.0
    %235 = vmatprep.subr.mxu0 0.0
    %236 = vmatpush1.msra.mxu0 0.0
    %237 = vmatprep.subr.mxu0 0.0
    %238 = vmatpush1.msra.mxu0 0.0
    %239 = vmatprep.subr.mxu0 0.0
    %240 = vmatpush1.msra.mxu0 0.0
    %241 = vmatprep.subr.mxu0 0.0
    %242 = vmatpush1.msra.mxu0 0.0
    %243 = vmatprep.subr.mxu0 0.0
    %244 = vmatpush1.msra.mxu0 0.0
    %245 = vmatprep.subr.mxu0 0.0
    %246 = vmatpush1.msra.mxu0 0.0
    %247 = vmatprep.subr.mxu0 0.0
    %248 = vmatpush1.msra.mxu0 0.0
    %249 = vmatprep.subr.mxu0 0.0
    %250 = vmatpush1.msra.mxu0 0.0
    %251 = vmatprep.subr.mxu0 0.0
    %252 = vmatpush1.msra.mxu0 0.0
    %253 = vmatprep.subr.mxu0 0.0
    %254 = vmatpush1.msra.mxu0 0.0
    %255 = vmatprep.subr.mxu0 0.0
    %256 = vmatpush1.msra.mxu0 0.0
    %257 = vmatprep.subr.mxu0 0.0
    %258 = vmatpush1.msra.mxu0 %v58
    %259 = vmatprep.subr.mxu0 0.0
    %260 = vmatpush1.msra.mxu0 %v57
    %261 = vmatprep.subr.mxu0 0.0
    %262 = vmatpush1.msra.mxu0 %v56
    %263 = vmatprep.subr.mxu0 0.0
    %264 = vmatpush1.msra.mxu0 %v55
    %265 = vmatprep.subr.mxu0 0.0
    %266 = vmatpush2.msra.mxu0 0.0
    %267 = vmatprep.subr.mxu0 0.0
    %268 = vmatpush2.msra.mxu0 0.0
    %269 = vmatprep.subr.mxu0 0.0
    %270 = vmatpush2.msra.mxu0 0.0
    %271 = vmatprep.subr.mxu0 0.0
    %272 = vmatpush2.msra.mxu0 0.0
    %273 = vmatprep.subr.mxu0 0.0
    %274 = vmatpush2.msra.mxu0 0.0
    %275 = vmatprep.subr.mxu0 0.0
    %276 = vmatpush2.msra.mxu0 0.0
    %277 = vmatprep.subr.mxu0 0.0
    %278 = vmatpush2.msra.mxu0 0.0
    %279 = vmatprep.subr.mxu0 0.0
    %280 = vmatpush2.msra.mxu0 0.0
    %281 = vmatprep.subr.mxu0 0.0
    %282 = vmatpush2.msra.mxu0 0.0
    %283 = vmatprep.subr.mxu0 0.0
    %284 = vmatpush2.msra.mxu0 0.0
    %285 = vmatprep.subr.mxu0 0.0
    %286 = vmatpush2.msra.mxu0 0.0
    %287 = vmatprep.subr.mxu0 0.0
    %288 = vmatpush2.msra.mxu0 0.0
    %289 = vmatprep.subr.mxu0 0.0
    %290 = vmatpush2.msra.mxu0 0.0
    %291 = vmatprep.subr.mxu0 0.0
    %292 = vmatpush2.msra.mxu0 0.0
    %293 = vmatprep.subr.mxu0 0.0
    %294 = vmatpush2.msra.mxu0 0.0
    %295 = vmatprep.subr.mxu0 0.0
    %296 = vmatpush2.msra.mxu0 0.0
    %297 = vmatprep.mubr.f32.mxu0 0.0
    %298 = vmatmul.mubr.f32.gmra.mxu0 %v231
    %v299 = vpop.f32.mrf.mxu0
    %v300 = vadd.f32 0.0, %v299
    %v301 = vpop.f32.mrf.mxu0
    %302 = vdwg.mxu0
    %s303 = sld [smem:[#allocation2]]
    %v304 = vstv %s303
    %v305 = vmul.f32 %v304, 1.442695
    %v306 = vpow.pop %v305
    %v307 = vmul.f32 %v219, %v219
    %vm308 = vcmask 254976
    %v309 = vsel %vm308, %v307, 0.0
    %310 = vadd.xlane.f32.xlu0 %v309
    %v311 = vpop.xlane.xlu0 %310
    %v312 = vadd.f32 %v311, 1e-12
    %v313 = vrsqrt.pop %v312
    %v314 = vmul.f32 %v306, %v313
    %v315 = vmul.f32 %v219, %v314
    %v316 = vmul.f32 %v300, %v300
    %v317 = vsel %vm60, %v316, 0.0
    %318 = vadd.xlane.f32.xlu0 %v317
    %v319 = vpop.xlane.xlu0 %318
    %v320 = vadd.f32 %v319, 1e-12
    %v321 = vrsqrt.pop %v320
    %v322 = vmul.f32 %v300, %v321
    %v324 = vsel %vm60, %v315, 0
    %v327 = vsel %vm60, %v322, 0
    %329 = vmatprep.subr.mxu0 0.0
    %330 = vmatpush1.xpose.msra.mxu0 0.0
    %331 = vmatprep.subr.mxu0 0.0
    %332 = vmatpush1.xpose.msra.mxu0 0.0
    %333 = vmatprep.subr.mxu0 0.0
    %334 = vmatpush1.xpose.msra.mxu0 0.0
    %335 = vmatprep.subr.mxu0 0.0
    %336 = vmatpush1.xpose.msra.mxu0 0.0
    %337 = vmatprep.subr.mxu0 0.0
    %338 = vmatpush1.xpose.msra.mxu0 0.0
    %339 = vmatprep.subr.mxu0 0.0
    %340 = vmatpush1.xpose.msra.mxu0 0.0
    %341 = vmatprep.subr.mxu0 0.0
    %342 = vmatpush1.xpose.msra.mxu0 0.0
    %343 = vmatprep.subr.mxu0 0.0
    %344 = vmatpush1.xpose.msra.mxu0 0.0
    %345 = vmatprep.subr.mxu0 0.0
    %346 = vmatpush1.xpose.msra.mxu0 0.0
    %347 = vmatprep.subr.mxu0 0.0
    %348 = vmatpush1.xpose.msra.mxu0 0.0
    %349 = vmatprep.subr.mxu0 0.0
    %350 = vmatpush1.xpose.msra.mxu0 0.0
    %351 = vmatprep.subr.mxu0 0.0
    %352 = vmatpush1.xpose.msra.mxu0 0.0
    %353 = vmatprep.subr.mxu0 0.0
    %354 = vmatpush1.xpose.msra.mxu0 0.0
    %355 = vmatprep.subr.mxu0 0.0
    %356 = vmatpush1.xpose.msra.mxu0 0.0
    %357 = vmatprep.subr.mxu0 0.0
    %358 = vmatpush1.xpose.msra.mxu0 0.0
    %359 = vmatprep.subr.mxu0 0.0
    %360 = vmatpush1.xpose.msra.mxu0 %v327
    %361 = vmatprep.subr.mxu0 0.0
    %362 = vmatpush2.xpose.msra.mxu0 0.0
    %363 = vmatprep.subr.mxu0 0.0
    %364 = vmatpush2.xpose.msra.mxu0 0.0
    %365 = vmatprep.subr.mxu0 0.0
    %366 = vmatpush2.xpose.msra.mxu0 0.0
    %367 = vmatprep.subr.mxu0 0.0
    %368 = vmatpush2.xpose.msra.mxu0 0.0
    %369 = vmatprep.subr.mxu0 0.0
    %370 = vmatpush2.xpose.msra.mxu0 0.0
    %371 = vmatprep.subr.mxu0 0.0
    %372 = vmatpush2.xpose.msra.mxu0 0.0
    %373 = vmatprep.subr.mxu0 0.0
    %374 = vmatpush2.xpose.msra.mxu0 0.0
    %375 = vmatprep.subr.mxu0 0.0
    %376 = vmatpush2.xpose.msra.mxu0 0.0
    %377 = vmatprep.subr.mxu0 0.0
    %378 = vmatpush2.xpose.msra.mxu0 0.0
    %379 = vmatprep.subr.mxu0 0.0
    %380 = vmatpush2.xpose.msra.mxu0 0.0
    %381 = vmatprep.subr.mxu0 0.0
    %382 = vmatpush2.xpose.msra.mxu0 0.0
    %383 = vmatprep.subr.mxu0 0.0
    %384 = vmatpush2.xpose.msra.mxu0 0.0
    %385 = vmatprep.subr.mxu0 0.0
    %386 = vmatpush2.xpose.msra.mxu0 0.0
    %387 = vmatprep.subr.mxu0 0.0
    %388 = vmatpush2.xpose.msra.mxu0 0.0
    %389 = vmatprep.subr.mxu0 0.0
    %390 = vmatpush2.xpose.msra.mxu0 0.0
    %391 = vmatprep.subr.mxu0 0.0
    %392 = vmatpush2.xpose.msra.mxu0 0.0
    %393 = vmatprep.mubr.f32.mxu0 0.0
    %394 = vmatmul.mubr.f32.gmra.mxu0 %v324
    %v395 = vpop.f32.mrf.mxu0
    %v396 = vadd.f32 0.0, %v395
    %v397 = vpop.f32.mrf.mxu0
    %398 = vdwg.mxu0
    %vm399 = vcmask 9216
    %400 = vst.msk [vmem:[#allocation3] sm:$0x3] %vm399, %v396
    // Predicated region
    $region14: #{prompt_net_forward.1} parent=1 // pred_check
      _
    $region15: #{prompt_net_forward.1} parent=1 // pred_check_branch
      %402 = sbr.rel (0) target = $region17
    $region16: #{prompt_net_forward.1} parent=1 // pred_region
      %s404 = ssub.s32 32, 32
      %405 = vsyncadd [#allocation4], %s404
      %s407 = sshll.u32 [#allocation3], 4
      %s408 = int_to_ptr.vmem [resolvable:$true] %s407
      %410 = dma.vmem_to_hbm [thread:$0]  %s408, 32, %s3, [#allocation4]
    $region17: #{prompt_net_forward.1} parent=1 // pred_fallthru
      _
    // Predicated region
    $region18: #{prompt_net_forward.1} parent=1 // pred_check
      _
    $region19: #{prompt_net_forward.1} parent=1 // pred_check_branch
      %412 = sbr.rel (0) target = $region21
    $region20: #{prompt_net_forward.1} parent=1 // pred_region
      %413 = dma.done [#allocation4], 32
    $region21: #{prompt_net_forward.1} parent=1 // pred_fallthru
      _
    %414 = vsyncpa [#allocation4], 1

</llo_original>
